<compile_context>
chip_gen: v6e
topology: v6e:2x2x1
jax: 0.10.0
libtpu: 0.0.40
codegen_flags: <defaults>
</compile_context>

<pallas_src>
import jax
import jax.numpy as jnp
from jax.experimental import pallas as pl
from jax.experimental.pallas import tpu as pltpu


def _make_single_step_kernel(inv_hw):
    """Whole spatial extent fits in one block: reduce, scale, store."""

    def kernel(x_ref, o_ref):
        x = x_ref[...].astype(jnp.float32)               # (row_tile, hw)
        s = jnp.sum(x, axis=-1, keepdims=True)           # one XLU reduce
        o_ref[...] = (s * inv_hw).astype(o_ref.dtype)

    return kernel


def _make_multi_step_kernel(hw, hw_tile, n_hw_steps, inv_hw):
    """Spatial axis is tiled: accumulate 128-lane partial sums in VMEM scratch,
    cross-lane reduce only at the final spatial step."""
    n_chunks = hw_tile // 128                            # hw_tile is 128-aligned
    needs_mask = (hw % hw_tile) != 0

    def kernel(x_ref, o_ref, acc_ref):
        j = pl.program_id(1)

        @pl.when(j == 0)
        def _init():
            acc_ref[...] = jnp.zeros_like(acc_ref)

        x = x_ref[...].astype(jnp.float32)               # (row_tile, hw_tile)

        # Only the final partial block (if any) needs masking so padded lanes
        # never leak into the sum; this branch is traced only when required.
        if needs_mask:
            lane = jax.lax.broadcasted_iota(jnp.int32, x.shape, 1)
            x = jnp.where(j * hw_tile + lane < hw, x, 0.0)

        # Collapse this block to a (row_tile, 128) partial with plain VPU adds
        # (static 128-lane slices = vreg picks), then one add into the scratch.
        partial = x[:, 0:128]
        for c in range(1, n_chunks):
            partial = partial + x[:, c * 128:(c + 1) * 128]
        acc_ref[...] += partial

        @pl.when(j == n_hw_steps - 1)
        def _finalize():
            s = jnp.sum(acc_ref[...], axis=-1, keepdims=True)   # single XLU reduce
            o_ref[...] = (s * inv_hw).astype(o_ref.dtype)

    return kernel


def _choose_tiles(rows, hw, dtype_bytes):
    """Pick (row_tile, hw_tile, n_hw_steps): ~4 MiB input blocks, balanced
    128-multiple spatial tiles, sublane-pack-aligned row tiles."""
    block_budget = 4 * 1024 * 1024
    # Sub-32-bit dtypes pack along sublanes: f32 -> 8, bf16 -> 16, int8/fp8 -> 32.
    row_align = max(8, 32 // max(1, dtype_bytes))

    max_hw_tile = 2048
    if hw <= max_hw_tile:
        n_hw_steps = 1
        hw_tile = hw                                      # full dim -> no 128 constraint
    else:
        n_hw_steps = -(-hw // max_hw_tile)
        hw_tile = -(-(-(-hw // n_hw_steps)) // 128) * 128  # balanced, 128-multiple

    rows_aligned = -(-rows // row_align) * row_align
    row_tile = block_budget // max(1, hw_tile * dtype_bytes)
    row_tile = max(row_align, (row_tile // row_align) * row_align)
    row_tile = min(row_tile, rows_aligned, 1024)
    row_tile = max(row_tile, row_align)
    return row_tile, hw_tile, n_hw_steps


def global_avg_pool2d(x):
    """Equivalent of F.avg_pool2d(x, kernel_size=x.shape[2:]) for NCHW input."""
    n, c, h, w = x.shape
    rows, hw = n * c, h * w
    x2d = x.reshape(rows, hw)

    row_tile, hw_tile, n_hw_steps = _choose_tiles(rows, hw, x.dtype.itemsize)
    n_row_steps = (rows + row_tile - 1) // row_tile
    inv_hw = 1.0 / float(hw)

    if n_hw_steps == 1:
        out2d = pl.pallas_call(
            _make_single_step_kernel(inv_hw),
            out_shape=jax.ShapeDtypeStruct((rows, 1), x.dtype),
            grid_spec=pltpu.PrefetchScalarGridSpec(
                num_scalar_prefetch=0,
                grid=(n_row_steps,),
                in_specs=[pl.BlockSpec((row_tile, hw_tile), lambda i: (i, 0))],
                out_specs=pl.BlockSpec((row_tile, 1), lambda i: (i, 0)),
            ),
            compiler_params=pltpu.CompilerParams(
                dimension_semantics=("parallel",),
            ),
        )(x2d)
    else:
        out2d = pl.pallas_call(
            _make_multi_step_kernel(hw, hw_tile, n_hw_steps, inv_hw),
            out_shape=jax.ShapeDtypeStruct((rows, 1), x.dtype),
            grid_spec=pltpu.PrefetchScalarGridSpec(
                num_scalar_prefetch=0,
                grid=(n_row_steps, n_hw_steps),
                in_specs=[pl.BlockSpec((row_tile, hw_tile), lambda i, j: (i, j))],
                out_specs=pl.BlockSpec((row_tile, 1), lambda i, j: (i, 0)),
                scratch_shapes=[pltpu.VMEM((row_tile, 128), jnp.float32)],
            ),
            compiler_params=pltpu.CompilerParams(
                # Row tiles are independent -> megacore-shardable; the spatial
                # axis is the reduction -> last and "arbitrary".
                dimension_semantics=("parallel", "arbitrary"),
            ),
        )(x2d)

    return out2d.reshape(n, c, 1, 1)


if __name__ == "__main__":
    key = jax.random.PRNGKey(0)

    # 1) Small case (single-step kernel path).
    x = jax.random.normal(key, (2, 4, 16, 16), dtype=jnp.float32)
    out = global_avg_pool2d(x)
    jax.block_until_ready(out)
    ref = jnp.mean(x, axis=(2, 3), keepdims=True)
    assert out.shape == (2, 4, 1, 1)
    assert jnp.allclose(out, ref, atol=1e-5, rtol=1e-5)

    # 2) Larger spatial case: multi-step path with balanced tiles (H*W = 2304
    #    -> hw_tile = 1152, 2 steps, no tail masking needed).
    x2 = jax.random.normal(jax.random.PRNGKey(1), (2, 4, 48, 48),
                           dtype=jnp.float32)
    out2 = global_avg_pool2d(x2)
    jax.block_until_ready(out2)
    ref2 = jnp.mean(x2, axis=(2, 3), keepdims=True)
    assert out2.shape == (2, 4, 1, 1)
    assert jnp.allclose(out2, ref2, atol=1e-5, rtol=1e-5)

    # 3) Ragged spatial case: exercises the masked-tail accumulation path
    #    (H*W = 2256 -> hw_tile = 1152, second block is partial).
    x3 = jax.random.normal(jax.random.PRNGKey(2), (2, 4, 48, 47),
                           dtype=jnp.float32)
    out3 = global_avg_pool2d(x3)
    jax.block_until_ready(out3)
    ref3 = jnp.mean(x3, axis=(2, 3), keepdims=True)
    assert out3.shape == (2, 4, 1, 1)
    assert jnp.allclose(out3, ref3, atol=1e-5, rtol=1e-5)

    # 4) bf16 input: native-dtype HBM blocks, f32 accumulation in VMEM.
    x4 = jax.random.normal(jax.random.PRNGKey(3), (2, 4, 16, 16),
                           dtype=jnp.bfloat16)
    out4 = global_avg_pool2d(x4)
    jax.block_until_ready(out4)
    ref4 = jnp.mean(x4.astype(jnp.float32), axis=(2, 3), keepdims=True)
    assert out4.shape == (2, 4, 1, 1)
    assert out4.dtype == jnp.bfloat16
    assert jnp.allclose(out4.astype(jnp.float32), ref4, atol=1e-2, rtol=1e-2)

    print("KERNEL_OK")
</pallas_src>

<mosaic_0001>
module attributes {stable_mosaic.version = 11 : i64} {
  func.func @kernel(%arg0: i32, %arg1: memref<8x256xf32, #tpu.memory_space<vmem>>, %arg2: memref<8x1xf32, #tpu.memory_space<vmem>>) attributes {dimension_semantics = [#tpu.dimension_semantics<parallel>], iteration_bounds = array<i64: 1>, scalar_prefetch = 0 : i64, scratch_operands = 0 : i64, tpu.core_type = #tpu.core_type<tc>, window_params = [{transform_indices = @transform_0, window_bounds = array<i64: 8, 256>}, {transform_indices = @transform_1, window_bounds = array<i64: 8, 1>}]} {
    %c0 = arith.constant 0 : index
    %c0_0 = arith.constant 0 : index
    %0 = vector.load %arg1[%c0, %c0_0] : memref<8x256xf32, #tpu.memory_space<vmem>>, vector<8x256xf32>
    %cst = arith.constant dense<0.000000e+00> : vector<8xf32>
    %1 = vector.multi_reduction <add>, %0, %cst [1] : vector<8x256xf32> to vector<8xf32>
    %2 = vector.shape_cast %1 : vector<8xf32> to vector<8x1xf32>
    %cst_1 = arith.constant 3.906250e-03 : f32
    %3 = vector.broadcast %cst_1 : f32 to vector<8x1xf32>
    %4 = arith.mulf %2, %3 : vector<8x1xf32>
    %c0_2 = arith.constant 0 : index
    %c0_3 = arith.constant 0 : index
    %5 = vector.load %arg2[%c0_2, %c0_3] : memref<8x1xf32, #tpu.memory_space<vmem>>, vector<8x1xf32>
    tpu.vector_store %arg2[%c0_2, %c0_3], %4 {strides = array<i32>} : memref<8x1xf32, #tpu.memory_space<vmem>>, vector<8x1xf32>,
    return
  }
  func.func @transform_0(%arg0: i32) -> (i32, i32) {
    %c0_i32 = arith.constant 0 : i32
    %c0_i32_0 = arith.constant 0 : i32
    return %arg0, %c0_i32 : i32, i32
  }
  func.func @transform_1(%arg0: i32) -> (i32, i32) {
    %c0_i32 = arith.constant 0 : i32
    %c0_i32_0 = arith.constant 0 : i32
    return %arg0, %c0_i32 : i32, i32
  }
}

</mosaic_0001>

<llo_original>
// kernel: tpu_custom_call.1
$region0: #{tpu_custom_call.1}
  #allocation0 [shape = 'u32[]', space=smem, size = 0x4, offset = 0x4, fixed_abs, tag = 'smem constant byte address 0x4 - core index']
  #allocation1 [shape = 'u32[144,128]{1,0:T(1,128)}', space=vmem, size = 0x12000, scoped, tag = 'internal scratch']
  %s0 = inlined_call_operand.hbm [shape: f32[8,256], index: 0, kind: input, shape index: {}]
  %s1 = inlined_call_operand.vmem [shape: f32[8,1], index: 1, kind: output, shape index: {}]
  %s2 = sld [smem:[#allocation0]]
  $region18: #{tpu_custom_call.1} parent=0
    _
  %s4 = ssub.s32 1, %s2
  %s5 = scalar_select 0, %s4, %s2
  $region1: #{tpu_custom_call.1} parent=0
    #allocation2 [shape = 'u8[8192]{0}', space=vmem, size = 0x2000, scoped, tag = 'input window, operand 0, single buffered']
    #allocation3 [shape = 's32[1]{0}', space=sflag, size = 0x4, scoped, tag = 'scoped memory for tpu_custom_call.1']
    %6 = vsyncpa [#allocation3], 0
    // Predicated region
    $region2: #{tpu_custom_call.1} parent=1 // pred_check
      _
    $region3: #{tpu_custom_call.1} parent=1 // pred_check_branch
      %8 = sbr.rel (0) target = $region5
    $region4: #{tpu_custom_call.1} parent=1 // pred_region
      %s10 = ssub.s32 256, 256
      %11 = vsyncadd [#allocation3], %s10
      %s13 = sshll.u32 [#allocation2], 4
      %s14 = int_to_ptr.vmem [resolvable:$true] %s13
      %16 = dma.hbm_to_vmem [thread:$0]  %s0, 256, %s14, [#allocation3]
    $region5: #{tpu_custom_call.1} parent=1 // pred_fallthru
      _
    // Predicated region
    $region6: #{tpu_custom_call.1} parent=1 // pred_check
      _
    $region7: #{tpu_custom_call.1} parent=1 // pred_check_branch
      %18 = sbr.rel (0) target = $region9
    $region8: #{tpu_custom_call.1} parent=1 // pred_region
      %19 = dma.done [#allocation3], 256
    $region9: #{tpu_custom_call.1} parent=1 // pred_fallthru
      _
    %v20 = vld [vmem:[#allocation2] sm:$0xff]
    %v21 = vld [vmem:[#allocation2 + $0x8] sm:$0xff]
    %v22 = vadd.f32 %v20, %v21
    %23 = vadd.xlane.f32.xlu0 %v22
    %v24 = vpop.xlane.xlu0 %23
    %v25 = vmul.f32 %v24, 0.00390625
    %vm26 = vcmask 7168
    %27 = vst.msk [vmem:[%s1] sm:$0xff] %vm26, %v25
    // Predicated region
    $region10: #{tpu_custom_call.1} parent=1 // pred_check
      _
    $region11: #{tpu_custom_call.1} parent=1 // pred_check_branch
      %29 = sbr.rel (0) target = $region13
    $region12: #{tpu_custom_call.1} parent=1 // pred_region
      _
    $region13: #{tpu_custom_call.1} parent=1 // pred_fallthru
      _
    // Predicated region
    $region14: #{tpu_custom_call.1} parent=1 // pred_check
      _
    $region15: #{tpu_custom_call.1} parent=1 // pred_check_branch
      %31 = sbr.rel (0) target = $region17
    $region16: #{tpu_custom_call.1} parent=1 // pred_region
      _
    $region17: #{tpu_custom_call.1} parent=1 // pred_fallthru
      _
    %32 = vsyncpa [#allocation3], 1

</llo_original>
